<compile_context>
chip_gen: v7x
topology: tpu7x:2x2x1
jax: 0.10.0
libtpu: 0.0.40
codegen_flags: <defaults>
</compile_context>

<pallas_src>
import jax
import jax.numpy as jnp
from jax.experimental import pallas as pl
from jax.experimental.pallas import tpu as pltpu


def _round_up(x, m):
    return ((x + m - 1) // m) * m


def _chip_vmem_bytes():
    """Physical VMEM of the local chip; conservative 64 MiB (v7x) fallback."""
    try:
        return int(pltpu.get_tpu_info().vmem_capacity_bytes)
    except Exception:
        return 64 * 1024 * 1024


def _make_mlp_kernel(resident_weights, dp, op):
    """Builds the (batch-tile, layer) grid-step kernel.

    x_ref: (TM, Dp)          bf16  padded input batch tile (constant over layers)
    w_ref: (L, Dp, Dp) or (1, Dp, Dp)  bf16  resident stack or streamed per-layer tile
    b_ref: (L, 1, Dp)  or (1, 1, Dp)   f32
    o_ref: (TM, Op)          f32   output tile (written only on the last layer)
    h_ref: (TM, Dp)          bf16  VMEM-resident activation carried across layers
    """

    def kernel(x_ref, w_ref, b_ref, o_ref, h_ref):
        l = pl.program_id(1)
        nl = pl.num_programs(1)

        @pl.when(l == 0)
        def _():
            h_ref[...] = x_ref[...]

        if resident_weights:
            w = w_ref[l]            # (Dp, Dp) bf16, dynamic index into resident stack
            b = b_ref[l]            # (1, Dp)  f32
        else:
            w = w_ref[0]
            b = b_ref[0]

        acc = jnp.dot(h_ref[...], w, preferred_element_type=jnp.float32)
        acc = acc + b               # f32 bias broadcast over rows

        @pl.when(l < nl - 1)
        def _():
            # ReLU in f32, round once to bf16 for the next layer's MXU feed.
            h_ref[...] = jnp.maximum(acc, 0.0).astype(h_ref.dtype)

        @pl.when(l == nl - 1)
        def _():
            out = acc if op == dp else acc[:, :op]   # static, lane-aligned slice
            o_ref[...] = out.astype(o_ref.dtype)     # final layer: no activation

    return kernel


def init_mlp_params(key, input_dim, hidden_size, output_dim, num_layers=2,
                    dtype=jnp.float32):
    """Mirrors the PyTorch module's shapes. W: [in, out] (transposed nn.Linear), b: [1, out]."""
    assert num_layers >= 2, "Just use a Linear layer..."
    dims = [input_dim] + [hidden_size] * (num_layers - 1) + [output_dim]
    params = []
    for i in range(num_layers):
        fan_in, fan_out = dims[i], dims[i + 1]
        key, wk, bk = jax.random.split(key, 3)
        bound = float(1.0 / (fan_in ** 0.5))   # matches nn.Linear's uniform bound
        w = jax.random.uniform(wk, (fan_in, fan_out), dtype, -bound, bound)
        b = jax.random.uniform(bk, (1, fan_out), dtype, -bound, bound)
        params.append((w, b))
    return params


def pack_params(params):
    """One-time packing: zero-pad every layer to a common lane-aligned Dp and stack.

    Done at init (NOT per forward call): the padded bf16 weight stack is built once.
    """
    num_layers = len(params)
    dims = [params[0][0].shape[0]] + [w.shape[1] for (w, _) in params]
    dp = max(_round_up(d, 128) for d in dims)
    in_dim, out_dim = dims[0], dims[-1]
    op = _round_up(out_dim, 128)

    w_stack = jnp.zeros((num_layers, dp, dp), jnp.bfloat16)
    b_stack = jnp.zeros((num_layers, 1, dp), jnp.float32)
    for l, (w, b) in enumerate(params):
        fi, fo = w.shape
        w_stack = w_stack.at[l, :fi, :fo].set(w.astype(jnp.bfloat16))
        b_stack = b_stack.at[l, 0, :fo].set(b.reshape(-1).astype(jnp.float32))

    return dict(w=w_stack, b=b_stack, dp=dp, op=op,
                in_dim=in_dim, out_dim=out_dim, num_layers=num_layers)


def mlp_forward(x, packed, *, tm=512):
    """Fused forward: (Linear -> ReLU -> Dropout(identity)) * (L-1) -> Linear."""
    w_stack, b_stack = packed["w"], packed["b"]
    dp, op = packed["dp"], packed["op"]
    in_dim, out_dim = packed["in_dim"], packed["out_dim"]
    num_layers = packed["num_layers"]

    m, k = x.shape
    assert k == in_dim

    # Batch tile: 16-aligned (bf16 sublane pack); keep >=2 tiles when possible so the
    # "parallel" axis feeds both TensorCores on v7x.
    tm = max(16, min(tm, _round_up(m, 16)))
    if _round_up(m, tm) // tm < 2 and tm >= 256:
        tm //= 2
    mp = _round_up(m, tm)

    # --- VMEM budgeting: resident weight stack if it fits, else stream per layer. ---
    vmem_cap = _chip_vmem_bytes()
    per_tile = (2 * tm * dp * 2      # x tile, bf16, double-buffered
                + 2 * tm * op * 4    # out tile, f32, double-buffered
                + tm * dp * 2)       # activation scratch, bf16
    bias_bytes = num_layers * 8 * dp * 4          # sublane-padded
    resident_bytes = num_layers * dp * dp * 2 + bias_bytes + per_tile
    streamed_bytes = 2 * dp * dp * 2 + 2 * 8 * dp * 4 + per_tile

    resident = resident_bytes <= int(vmem_cap * 0.75)
    need = resident_bytes if resident else streamed_bytes
    vmem_limit = int(min(max(int(need * 1.25) + (4 << 20), 32 << 20), vmem_cap))

    if resident:
        # Constant block index -> Pallas DMAs the full stack once and keeps it resident.
        w_spec = pl.BlockSpec((num_layers, dp, dp), lambda i, l: (0, 0, 0))
        b_spec = pl.BlockSpec((num_layers, 1, dp), lambda i, l: (0, 0, 0))
    else:
        w_spec = pl.BlockSpec((1, dp, dp), lambda i, l: (l, 0, 0))
        b_spec = pl.BlockSpec((1, 1, dp), lambda i, l: (l, 0, 0))

    kernel = _make_mlp_kernel(resident, dp, op)

    def _fwd(x_in):
        x_pad = (jnp.zeros((mp, dp), jnp.bfloat16)
                 .at[:m, :k].set(x_in.astype(jnp.bfloat16)))
        out_pad = pl.pallas_call(
            kernel,
            out_shape=jax.ShapeDtypeStruct((mp, op), jnp.float32),
            grid_spec=pltpu.PrefetchScalarGridSpec(
                num_scalar_prefetch=0,
                grid=(mp // tm, num_layers),
                in_specs=[
                    pl.BlockSpec((tm, dp), lambda i, l: (i, 0)),   # x (constant over l)
                    w_spec,
                    b_spec,
                ],
                out_specs=pl.BlockSpec((tm, op), lambda i, l: (i, 0)),
                scratch_shapes=[pltpu.VMEM((tm, dp), jnp.bfloat16)],
            ),
            compiler_params=pltpu.CompilerParams(
                dimension_semantics=("parallel", "arbitrary"),
                vmem_limit_bytes=vmem_limit,
            ),
        )(x_pad, w_stack, b_stack)
        return out_pad[:m, :out_dim]

    return jax.jit(_fwd)(x)


if __name__ == "__main__":
    key = jax.random.PRNGKey(0)

    batch = 8
    input_dim = 32
    hidden_size = 32
    output_dim = 16
    num_layers = 3

    pkey, xkey = jax.random.split(key)
    params = init_mlp_params(pkey, input_dim, hidden_size, output_dim, num_layers)
    packed = pack_params(params)                     # built once, outside the forward
    x = jax.random.normal(xkey, (batch, input_dim), jnp.float32)

    out = mlp_forward(x, packed)
    out = jax.block_until_ready(out)

    # Reference mirroring the kernel's numerics (bf16 operands, f32 accumulate,
    # bias add + ReLU in f32, last layer unactivated, dropout = identity).
    h = x
    for i, (w, b) in enumerate(params):
        h = jnp.dot(h.astype(jnp.bfloat16), w.astype(jnp.bfloat16),
                    preferred_element_type=jnp.float32) + b.astype(jnp.float32)
        if i != len(params) - 1:
            h = jnp.maximum(h, 0.0)

    assert out.shape == (batch, output_dim)
    err = float(jnp.max(jnp.abs(out - h)))
    assert jnp.allclose(out, h, atol=2e-3, rtol=2e-3), err

    print("KERNEL_OK")
</pallas_src>

<mosaic_0001>
module attributes {stable_mosaic.version = 11 : i64} {
  func.func @kernel(%arg0: i32, %arg1: i32, %arg2: memref<16x128xbf16, #tpu.memory_space<vmem>>, %arg3: memref<3x128x128xbf16, #tpu.memory_space<vmem>>, %arg4: memref<3x1x128xf32, #tpu.memory_space<vmem>>, %arg5: memref<16x128xf32, #tpu.memory_space<vmem>>, %arg6: memref<16x128xbf16, #tpu.memory_space<vmem>>) attributes {dimension_semantics = [#tpu.dimension_semantics<parallel>, #tpu.dimension_semantics<arbitrary>], iteration_bounds = array<i64: 1, 3>, scalar_prefetch = 0 : i64, scratch_operands = 1 : i64, tpu.core_type = #tpu.core_type<tc>, window_params = [{transform_indices = @transform_0, window_bounds = array<i64: 16, 128>}, {pipeline_mode = #tpu.pipeline_mode<synchronous>, transform_indices = @transform_1, window_bounds = array<i64: 3, 128, 128>}, {pipeline_mode = #tpu.pipeline_mode<synchronous>, transform_indices = @transform_2, window_bounds = array<i64: 3, 1, 128>}, {transform_indices = @transform_3, window_bounds = array<i64: 16, 128>}]} {
    %c0_i32 = arith.constant 0 : i32
    %0 = arith.cmpi eq, %arg1, %c0_i32 : i32
    %1 = arith.extui %0 : i1 to i32
    %c0_i32_0 = arith.constant 0 : i32
    %2 = arith.cmpi ne, %1, %c0_i32_0 : i32
    scf.if %2 {
      %c0_9 = arith.constant 0 : index
      %c0_10 = arith.constant 0 : index
      %19 = vector.load %arg2[%c0_9, %c0_10] : memref<16x128xbf16, #tpu.memory_space<vmem>>, vector<16x128xbf16>
      %c0_11 = arith.constant 0 : index
      %c0_12 = arith.constant 0 : index
      %20 = vector.load %arg6[%c0_11, %c0_12] : memref<16x128xbf16, #tpu.memory_space<vmem>>, vector<16x128xbf16>
      tpu.vector_store %arg6[%c0_11, %c0_12], %19 {strides = array<i32>} : memref<16x128xbf16, #tpu.memory_space<vmem>>, vector<16x128xbf16>,
    } else {
    }
    %3 = arith.index_cast %arg1 : i32 to index
    %c0 = arith.constant 0 : index
    %c0_1 = arith.constant 0 : index
    %4 = vector.load %arg3[%3, %c0, %c0_1] : memref<3x128x128xbf16, #tpu.memory_space<vmem>>, vector<1x128x128xbf16>
    %5 = vector.shape_cast %4 : vector<1x128x128xbf16> to vector<128x128xbf16>
    %6 = arith.index_cast %arg1 : i32 to index
    %c0_2 = arith.constant 0 : index
    %c0_3 = arith.constant 0 : index
    %7 = vector.load %arg4[%6, %c0_2, %c0_3] : memref<3x1x128xf32, #tpu.memory_space<vmem>>, vector<1x1x128xf32>
    %8 = vector.shape_cast %7 : vector<1x1x128xf32> to vector<1x128xf32>
    %c0_4 = arith.constant 0 : index
    %c0_5 = arith.constant 0 : index
    %9 = vector.load %arg6[%c0_4, %c0_5] : memref<16x128xbf16, #tpu.memory_space<vmem>>, vector<16x128xbf16>
    %cst = arith.constant dense<0.000000e+00> : vector<16x128xf32>
    %10 = tpu.matmul %9, %5, %cst {dimension_numbers = #tpu.dot_dimension_numbers<[1], [0], [0], [1], [0, 0, 1, 1], [], []>} : vector<16x128xbf16>, vector<128x128xbf16>, vector<16x128xf32> -> vector<16x128xf32>
    %11 = vector.broadcast %8 : vector<1x128xf32> to vector<16x128xf32>
    %12 = arith.addf %10, %11 : vector<16x128xf32>
    %c2_i32 = arith.constant 2 : i32
    %13 = arith.cmpi slt, %arg1, %c2_i32 : i32
    %14 = arith.extui %13 : i1 to i32
    %c0_i32_6 = arith.constant 0 : i32
    %15 = arith.cmpi ne, %14, %c0_i32_6 : i32
    scf.if %15 {
      %cst_9 = arith.constant 0.000000e+00 : f32
      %19 = vector.broadcast %cst_9 : f32 to vector<16x128xf32>
      %20 = arith.maximumf %12, %19 : vector<16x128xf32>
      %21 = arith.truncf %20 : vector<16x128xf32> to vector<16x128xbf16>
      %c0_10 = arith.constant 0 : index
      %c0_11 = arith.constant 0 : index
      %22 = vector.load %arg6[%c0_10, %c0_11] : memref<16x128xbf16, #tpu.memory_space<vmem>>, vector<16x128xbf16>
      tpu.vector_store %arg6[%c0_10, %c0_11], %21 {strides = array<i32>} : memref<16x128xbf16, #tpu.memory_space<vmem>>, vector<16x128xbf16>,
    } else {
    }
    %c2_i32_7 = arith.constant 2 : i32
    %16 = arith.cmpi eq, %arg1, %c2_i32_7 : i32
    %17 = arith.extui %16 : i1 to i32
    %c0_i32_8 = arith.constant 0 : i32
    %18 = arith.cmpi ne, %17, %c0_i32_8 : i32
    scf.if %18 {
      %c0_9 = arith.constant 0 : index
      %c0_10 = arith.constant 0 : index
      %19 = vector.load %arg5[%c0_9, %c0_10] : memref<16x128xf32, #tpu.memory_space<vmem>>, vector<16x128xf32>
      tpu.vector_store %arg5[%c0_9, %c0_10], %12 {strides = array<i32>} : memref<16x128xf32, #tpu.memory_space<vmem>>, vector<16x128xf32>,
    } else {
    }
    return
  }
  func.func @transform_0(%arg0: i32, %arg1: i32) -> (i32, i32) {
    %c0_i32 = arith.constant 0 : i32
    %c0_i32_0 = arith.constant 0 : i32
    return %arg0, %c0_i32 : i32, i32
  }
  func.func @transform_1(%arg0: i32, %arg1: i32) -> (i32, i32, i32) {
    %c0_i32 = arith.constant 0 : i32
    %c0_i32_0 = arith.constant 0 : i32
    %c0_i32_1 = arith.constant 0 : i32
    %c0_i32_2 = arith.constant 0 : i32
    return %c0_i32, %c0_i32_0, %c0_i32_1 : i32, i32, i32
  }
  func.func @transform_2(%arg0: i32, %arg1: i32) -> (i32, i32, i32) {
    %c0_i32 = arith.constant 0 : i32
    %c0_i32_0 = arith.constant 0 : i32
    %c0_i32_1 = arith.constant 0 : i32
    %c0_i32_2 = arith.constant 0 : i32
    return %c0_i32, %c0_i32_0, %c0_i32_1 : i32, i32, i32
  }
  func.func @transform_3(%arg0: i32, %arg1: i32) -> (i32, i32) {
    %c0_i32 = arith.constant 0 : i32
    %c0_i32_0 = arith.constant 0 : i32
    return %arg0, %c0_i32 : i32, i32
  }
}

</mosaic_0001>

<llo_original>
// kernel: _fwd.1
$region0: #{_fwd.1}
  #allocation0 [shape = 'u32[]', space=smem, size = 0x4, offset = 0x4, fixed_abs, tag = 'smem constant byte address 0x4 - core index']
  #allocation1 [shape = 'u32[144,128]{1,0:T(1,128)}', space=vmem, size = 0x12000, scoped, tag = 'internal scratch']
  #allocation2 [shape = 'bf16[16,128]{1,0:T(16,128)(2,1)}', space=vmem, size = 0x1000, scoped, tag = 'scratch operand']
  %s0 = inlined_call_operand.vmem [shape: bf16[16,128], index: 0, kind: input, shape index: {}]
  %s1 = inlined_call_operand.hbm [shape: bf16[3,128,128], index: 1, kind: input, shape index: {}]
  %s2 = inlined_call_operand.vmem [shape: f32[3,1,128], index: 2, kind: input, shape index: {}]
  %s3 = inlined_call_operand.vmem [shape: f32[16,128], index: 3, kind: output, shape index: {}]
  %s4 = sld [smem:[#allocation0]]
  $region61: #{_fwd.1} parent=0
    _
  %s6 = ssub.s32 1, %s4
  %s7 = scalar_select 0, %s6, %s4
  $region1: #{_fwd.1} parent=0
    #allocation3 [shape = 'u8[98304]{0}', space=vmem, size = 0x18000, scoped, tag = 'input window, operand 1, single buffered']
    #allocation4 [shape = 's32[2]{0}', space=sflag, size = 0x8, scoped, tag = 'scoped memory for _fwd.1']
    %8 = vsyncpa [#allocation4], 0
    loop: start=0, step=1, limit=5
    $region2: #{_fwd.1} parent=1 // loop_pre_header
      _
    $region3: #{_fwd.1} parent=1 // loop_header
      %s10 = sphi 0, %s14
      %p11 = scmp.ge.s32.totalorder %s10, 5
      %s17 = sphi 0, %s29
      %s18 = sphi 0, %s25
      %s19 = sphi 0, %s17
      %s20 = sphi 0, %s18
      %s21 = sphi 0, %s19
      %s22 = sphi 0, %s20
      %s32 = sphi 0, %s34
      %s35 = sphi 0, %s32
      %s36 = sphi 0, %s35
      %s52 = sphi 0, %s36
      %s56 = sphi 0, %s56
      %s58 = sphi 0, %s56
      %s59 = sphi 0, %s58
      %s73 = sphi 0, %s59
      %s77 = sphi 0, %s77
      %s79 = sphi 0, %s77
      %s80 = sphi 0, %s79
      %s94 = sphi 0, %s80
      %s100 = sphi 0, %s102
      %s103 = sphi 0, %s100
      %s104 = sphi 0, %s103
      %s120 = sphi 0, %s104
    $region4: #{_fwd.1} parent=1 // loop_header_branch
      %13 = sbr.rel (%p11) target = $region8
    $region5: #{_fwd.1} parent=1 // loop_body
      %s15 = ssub.s32 %s10, 1
      %s16 = ssub.s32 %s10, 2
      %s23 = sadd.s32 1, %s18
      %p24 = scmp.ge.s32.totalorder %s23, 3
      %s25 = scalar_select %p24, 0, %s23
      %s26 = sadd.s32 1, %s17
      %s27 = scalar_select %p24, %s26, %s17
      %p28 = scmp.ge.s32.totalorder %s27, 1
      %s29 = scalar_select %p28, 0, %s27
      %s30 = ssub.s32 %s17, %s29
      %p31 = scmp.eq.s32.totalorder %s30, 0
      %s33 = sadd.s32 %s32, 1
      %s34 = scalar_select %p31, %s32, %s33
      %p37 = pneg %p31
      %p38 = scmp.eq.s32.totalorder %s10, 2
      %p39 = por %p37, %p38
      %p40 = scmp.ne.s32.totalorder %s32, %s35
      %p41 = scmp.eq.s32.totalorder %s10, 0
      %p42 = por %p40, %p41
      %p43 = scmp.ne.s32.totalorder %s32, %s35
      %p44 = scmp.eq.s32.totalorder %s15, 2
      %p45 = por %p43, %p44
      %p46 = scmp.ne.s32.totalorder %s35, %s36
      %p47 = scmp.eq.s32.totalorder %s15, 0
      %p48 = por %p46, %p47
      %p49 = scmp.ne.s32.totalorder %s35, %s36
      %p50 = scmp.eq.s32.totalorder %s16, 2
      %p51 = por %p49, %p50
      %p53 = scmp.ne.s32.totalorder %s36, %s52
      %p54 = scmp.eq.s32.totalorder %s16, 0
      %p55 = por %p53, %p54
      %s57 = sadd.s32 %s56, 1
      %p60 = scmp.eq.s32.totalorder %s10, 2
      %p61 = scmp.ne.s32.totalorder %s56, %s58
      %p62 = scmp.eq.s32.totalorder %s10, 0
      %p63 = por %p61, %p62
      %p64 = scmp.ne.s32.totalorder %s56, %s58
      %p65 = scmp.eq.s32.totalorder %s15, 2
      %p66 = por %p64, %p65
      %p67 = scmp.ne.s32.totalorder %s58, %s59
      %p68 = scmp.eq.s32.totalorder %s15, 0
      %p69 = por %p67, %p68
      %p70 = scmp.ne.s32.totalorder %s58, %s59
      %p71 = scmp.eq.s32.totalorder %s16, 2
      %p72 = por %p70, %p71
      %p74 = scmp.ne.s32.totalorder %s59, %s73
      %p75 = scmp.eq.s32.totalorder %s16, 0
      %p76 = por %p74, %p75
      %s78 = sadd.s32 %s77, 1
      %p81 = scmp.eq.s32.totalorder %s10, 2
      %p82 = scmp.ne.s32.totalorder %s77, %s79
      %p83 = scmp.eq.s32.totalorder %s10, 0
      %p84 = por %p82, %p83
      %p85 = scmp.ne.s32.totalorder %s77, %s79
      %p86 = scmp.eq.s32.totalorder %s15, 2
      %p87 = por %p85, %p86
      %p88 = scmp.ne.s32.totalorder %s79, %s80
      %p89 = scmp.eq.s32.totalorder %s15, 0
      %p90 = por %p88, %p89
      %p91 = scmp.ne.s32.totalorder %s79, %s80
      %p92 = scmp.eq.s32.totalorder %s16, 2
      %p93 = por %p91, %p92
      %p95 = scmp.ne.s32.totalorder %s80, %s94
      %p96 = scmp.eq.s32.totalorder %s16, 0
      %p97 = por %p95, %p96
      %s98 = ssub.s32 %s17, %s29
      %p99 = scmp.eq.s32.totalorder %s98, 0
      %s101 = sadd.s32 %s100, 1
      %s102 = scalar_select %p99, %s100, %s101
      %p105 = pneg %p99
      %p106 = scmp.eq.s32.totalorder %s10, 2
      %p107 = por %p105, %p106
      %p108 = scmp.ne.s32.totalorder %s100, %s103
      %p109 = scmp.eq.s32.totalorder %s10, 0
      %p110 = por %p108, %p109
      %p111 = scmp.ne.s32.totalorder %s100, %s103
      %p112 = scmp.eq.s32.totalorder %s15, 2
      %p113 = por %p111, %p112
      %p114 = scmp.ne.s32.totalorder %s103, %s104
      %p115 = scmp.eq.s32.totalorder %s15, 0
      %p116 = por %p114, %p115
      %p117 = scmp.ne.s32.totalorder %s103, %s104
      %p118 = scmp.eq.s32.totalorder %s16, 2
      %p119 = por %p117, %p118
      %p121 = scmp.ne.s32.totalorder %s104, %s120
      %p122 = scmp.eq.s32.totalorder %s16, 0
      %p123 = por %p121, %p122
      %p124 = scmp.le.s32.totalorder 1, %s10
      %p125 = scmp.lt.s32.totalorder %s10, 4
      %p126 = pnand %p124, %p125
      %p127 = pneg %p126
      // Predicated region
      $region9: #{_fwd.1} parent=5 // pred_check
        _
      $region10: #{_fwd.1} parent=5 // pred_check_branch
        %129 = sbr.rel (%p126) target = $region12
      $region11: #{_fwd.1} parent=5 // pred_region
        %s130 = ssub.s32 %s10, 1
        // Predicated region
        $region13: #{_fwd.1} parent=11 // pred_check
          %p131 = pneg %p48
        $region14: #{_fwd.1} parent=11 // pred_check_branch
          %133 = sbr.rel (%p131) target = $region16
        $region15: #{_fwd.1} parent=11 // pred_region
          %s134 = smul.u32 2, %s19
          %p135 = scmp.lt.s32.totalorder %s134, 1
          %s136 = scalar_select %p135, %s134, 1
          %s137 = smul.addr %s136, 4
          %s138 = scalar_lea.vmem %s0, %s137
          %s139 = smul.u32 2, %s19
        $region16: #{_fwd.1} parent=11 // pred_fallthru
          _
        // Predicated region
        $region17: #{_fwd.1} parent=11 // pred_check
          %p140 = pneg %p69
        $region18: #{_fwd.1} parent=11 // pred_check_branch
          %142 = sbr.rel (%p140) target = $region20
        $region19: #{_fwd.1} parent=11 // pred_region
          %s144 = ssub.s32 3072, 3072
          %145 = vsyncadd [#allocation4], %s144
          %s146 = sshll.u32 [#allocation3], 4
          %s147 = int_to_ptr.vmem [resolvable:$true] %s146
          %152 = dma.hbm_to_vmem [thread:$0]  %s1, 3072, %s147, [#allocation4], 64, 64, 4
        $region20: #{_fwd.1} parent=11 // pred_fallthru
          _
        // Predicated region
        $region21: #{_fwd.1} parent=11 // pred_check
          %p153 = pneg %p90
        $region22: #{_fwd.1} parent=11 // pred_check_branch
          %155 = sbr.rel (%p153) target = $region24
        $region23: #{_fwd.1} parent=11 // pred_region
          _
        $region24: #{_fwd.1} parent=11 // pred_fallthru
          _
      $region12: #{_fwd.1} parent=5 // pred_fallthru
        _
      %p156 = scmp.lt.s32.totalorder %s10, 3
      // Predicated region
      $region25: #{_fwd.1} parent=5 // pred_check
        %p157 = pneg %p156
      $region26: #{_fwd.1} parent=5 // pred_check_branch
        %159 = sbr.rel (%p157) target = $region28
      $region27: #{_fwd.1} parent=5 // pred_region
        _
      $region28: #{_fwd.1} parent=5 // pred_fallthru
        _
      %p160 = scmp.le.s32.totalorder 1, %s10
      %p161 = scmp.lt.s32.totalorder %s10, 4
      %p162 = pnand %p160, %p161
      %p163 = pneg %p162
      // Predicated region
      $region29: #{_fwd.1} parent=5 // pred_check
        _
      $region30: #{_fwd.1} parent=5 // pred_check_branch
        %165 = sbr.rel (%p162) target = $region32
      $region31: #{_fwd.1} parent=5 // pred_region
        %s166 = ssub.s32 %s10, 1
        // Predicated region
        $region33: #{_fwd.1} parent=31 // pred_check
          %p167 = pneg %p69
        $region34: #{_fwd.1} parent=31 // pred_check_branch
          %169 = sbr.rel (%p167) target = $region36
        $region35: #{_fwd.1} parent=31 // pred_region
          %170 = dma.done [#allocation4], 3072
        $region36: #{_fwd.1} parent=31 // pred_fallthru
          _
        %s171 = smul.u32 2, %s19
        %p172 = scmp.lt.s32.totalorder %s171, 1
        %s173 = scalar_select %p172, %s171, 1
        %s174 = smul.addr %s173, 4
        %s175 = scalar_lea.vmem %s0, %s174
        %p176 = pneg %p48
        %p177 = pneg %p45
        %p178 = pneg %p69
        %p179 = pneg %p66
        %p180 = pneg %p90
        %p181 = pneg %p87
        %p182 = pneg %p116
        %p183 = pneg %p113
        %s184 = smul.u32 2, %s19
        %p185 = scmp.lt.s32.totalorder %s184, 1
        %s186 = scalar_select %p185, %s184, 1
        %s187 = smul.addr %s186, 8
        %s188 = scalar_lea.vmem %s3, %s187
        %s189 = smul.u32 2, %s19
        %p190 = scmp.lt.s32.totalorder %s189, 1
        %s191 = scalar_select %p190, %s189, 1
        %s192 = smul.addr %s191, 4
        %s193 = scalar_lea.vmem %s0, %s192
        %s194 = smul.u32 2, %s19
        %s195 = smul.u32 2, %s19
        %p196 = scmp.lt.s32.totalorder %s195, 1
        %s197 = scalar_select %p196, %s195, 1
        %s198 = smul.addr %s197, 8
        %s199 = scalar_lea.vmem %s3, %s198
        %s200 = smul.u32 2, %s19
        %p202 = scmp.eq.s32.totalorder %s20, 0
        // Predicated region
        $region37: #{_fwd.1} parent=31 // pred_check
          %p203 = pneg %p202
        $region38: #{_fwd.1} parent=31 // pred_check_branch
          %205 = sbr.rel (%p203) target = $region40
        $region39: #{_fwd.1} parent=31 // pred_region
          %v206 = vld [vmem:[%s193] sm:$0xf]
          %v207 = vld [vmem:[%s193 + $0x4] sm:$0xf]
          %v210 = vunpack.c.l.b16 %v206
          %v211 = vunpack.c.l.b16 %v207
          %v212 = vpack.c.b16 %v211, %v210
          %214 = vst [vmem:[#allocation2] sm:$0xff] %v212
        $region40: #{_fwd.1} parent=31 // pred_fallthru
          _
        %s215 = smul.u32 %s20, 16
        %s216 = smul.addr %s215, 4
        %s217 = scalar_lea.vmem [#allocation3], %s216
        %v218 = vld [vmem:[%s217] sm:$0xf]
        %v219 = vld [vmem:[%s217 + $0x4] sm:$0xf]
        %v220 = vld [vmem:[%s217 + $0x8] sm:$0xf]
        %v221 = vld [vmem:[%s217 + $0xc] sm:$0xf]
        %v222 = vld [vmem:[%s217 + $0x10] sm:$0xf]
        %v223 = vld [vmem:[%s217 + $0x14] sm:$0xf]
        %v224 = vld [vmem:[%s217 + $0x18] sm:$0xf]
        %v225 = vld [vmem:[%s217 + $0x1c] sm:$0xf]
        %v226 = vld [vmem:[%s217 + $0x20] sm:$0xf]
        %v227 = vld [vmem:[%s217 + $0x24] sm:$0xf]
        %v228 = vld [vmem:[%s217 + $0x28] sm:$0xf]
        %v229 = vld [vmem:[%s217 + $0x2c] sm:$0xf]
        %v230 = vld [vmem:[%s217 + $0x30] sm:$0xf]
        %v231 = vld [vmem:[%s217 + $0x34] sm:$0xf]
        %v232 = vld [vmem:[%s217 + $0x38] sm:$0xf]
        %v233 = vld [vmem:[%s217 + $0x3c] sm:$0xf]
        %s234 = scalar_lea.vmem %s2, %s20
        %v235 = vld [vmem:[%s234] sm:$0x1]
        %v236 = vld [vmem:[#allocation2] sm:$0xff]
        %v238 = vlaneseq
        %v239 = vshrl.u32 %v238, 7
        %v240 = vsub.s32 0, %v239
        %v241 = vrot.slane %v235, %v240
        %v259 = vunpack.c.l.b16 %v218
        %v260 = vunpack.c.l.b16 %v219
        %v261 = vunpack.c.l.b16 %v220
        %v262 = vunpack.c.l.b16 %v221
        %v263 = vunpack.c.l.b16 %v222
        %v264 = vunpack.c.l.b16 %v223
        %v265 = vunpack.c.l.b16 %v224
        %v266 = vunpack.c.l.b16 %v225
        %v267 = vunpack.c.l.b16 %v226
        %v268 = vunpack.c.l.b16 %v227
        %v269 = vunpack.c.l.b16 %v228
        %v270 = vunpack.c.l.b16 %v229
        %v271 = vunpack.c.l.b16 %v230
        %v272 = vunpack.c.l.b16 %v231
        %v273 = vunpack.c.l.b16 %v232
        %v274 = vunpack.c.l.b16 %v233
        %v275 = vpack.c.b16 %v260, %v259
        %v276 = vpack.c.b16 %v262, %v261
        %v277 = vpack.c.b16 %v264, %v263
        %v278 = vpack.c.b16 %v266, %v265
        %v279 = vpack.c.b16 %v268, %v267
        %v280 = vpack.c.b16 %v270, %v269
        %v281 = vpack.c.b16 %v272, %v271
        %v282 = vpack.c.b16 %v274, %v273
        %291 = vmatprep.subr.bf16.mxu0 0
        %292 = vmatpush1.bf16.msra.mxu0 %v275
        %293 = vmatprep.subr.bf16.mxu0 0
        %294 = vmatpush1.bf16.msra.mxu0 %v276
        %295 = vmatprep.subr.bf16.mxu0 0
        %296 = vmatpush1.bf16.msra.mxu0 %v277
        %297 = vmatprep.subr.bf16.mxu0 0
        %298 = vmatpush1.bf16.msra.mxu0 %v278
        %299 = vmatprep.subr.bf16.mxu0 0
        %300 = vmatpush1.bf16.msra.mxu0 %v279
        %301 = vmatprep.subr.bf16.mxu0 0
        %302 = vmatpush1.bf16.msra.mxu0 %v280
        %303 = vmatprep.subr.bf16.mxu0 0
        %304 = vmatpush1.bf16.msra.mxu0 %v281
        %305 = vmatprep.subr.bf16.mxu0 0
        %306 = vmatpush1.bf16.msra.mxu0 %v282
        %307 = vmatprep.subr.bf16.mxu0 0
        %308 = vmatpush1.bf16.msra.mxu0 0
        %309 = vmatprep.subr.bf16.mxu0 0
        %310 = vmatpush1.bf16.msra.mxu0 0
        %311 = vmatprep.subr.bf16.mxu0 0
        %312 = vmatpush1.bf16.msra.mxu0 0
        %313 = vmatprep.subr.bf16.mxu0 0
        %314 = vmatpush1.bf16.msra.mxu0 0
        %315 = vmatprep.subr.bf16.mxu0 0
        %316 = vmatpush1.bf16.msra.mxu0 0
        %317 = vmatprep.subr.bf16.mxu0 0
        %318 = vmatpush1.bf16.msra.mxu0 0
        %319 = vmatprep.subr.bf16.mxu0 0
        %320 = vmatpush1.bf16.msra.mxu0 0
        %321 = vmatprep.subr.bf16.mxu0 0
        %322 = vmatpush1.bf16.msra.mxu0 0
        %323 = vmatprep.mubr.bf16.mxu0 0
        %324 = vmatmul.mubr.bf16.gmra.mrb[0].mxu0 %v236
        %v325 = vpop.f32.mrb[0].mxu0
        %v326 = vadd.f32 %v241, %v325
        %v327 = vpop.f32.mrb[0].mxu0
        %v328 = vpop.f32.mrb[0].mxu0
        %v329 = vadd.f32 %v241, %v328
        %v330 = vpop.f32.mrb[0].mxu0
        %331 = vdwg.mxu0
        %p332 = scmp.lt.s32.totalorder %s20, 2
        // Predicated region
        $region41: #{_fwd.1} parent=31 // pred_check
          %p333 = pneg %p332
        $region42: #{_fwd.1} parent=31 // pred_check_branch
          %335 = sbr.rel (%p333) target = $region44
        $region43: #{_fwd.1} parent=31 // pred_region
          %v336 = vmax.f32 %v326, 0.0
          %v337 = vmax.f32 %v329, 0.0
          %v338 = vpack.c.bf16 %v337, %v336
          %339 = vst [vmem:[#allocation2] sm:$0xff] %v338
        $region44: #{_fwd.1} parent=31 // pred_fallthru
          _
        %p340 = scmp.eq.s32.totalorder %s20, 2
        // Predicated region
        $region45: #{_fwd.1} parent=31 // pred_check
          %p341 = pneg %p340
        $region46: #{_fwd.1} parent=31 // pred_check_branch
          %343 = sbr.rel (%p341) target = $region48
        $region47: #{_fwd.1} parent=31 // pred_region
          %344 = vst [vmem:[%s199] sm:$0xff] %v326
          %345 = vst [vmem:[%s199 + $0x8] sm:$0xff] %v329
        $region48: #{_fwd.1} parent=31 // pred_fallthru
          _
        %s346 = smul.u32 2, %s19
        %p347 = scmp.lt.s32.totalorder %s346, 1
        %s348 = scalar_select %p347, %s346, 1
        %s349 = smul.addr %s348, 8
        %s350 = scalar_lea.vmem %s3, %s349
        // Predicated region
        $region49: #{_fwd.1} parent=31 // pred_check
          %p351 = pneg %p113
        $region50: #{_fwd.1} parent=31 // pred_check_branch
          %353 = sbr.rel (%p351) target = $region52
        $region51: #{_fwd.1} parent=31 // pred_region
          %s354 = smul.u32 2, %s19
        $region52: #{_fwd.1} parent=31 // pred_fallthru
          _
        // Predicated region
        $region53: #{_fwd.1} parent=31 // pred_check
          %p355 = pneg %p113
        $region54: #{_fwd.1} parent=31 // pred_check_branch
          %357 = sbr.rel (%p355) target = $region56
        $region55: #{_fwd.1} parent=31 // pred_region
          %s358 = smul.u32 2, %s19
          %p359 = scmp.lt.s32.totalorder %s358, 1
          %s360 = scalar_select %p359, %s358, 1
          %s361 = smul.addr %s360, 8
          %s362 = scalar_lea.vmem %s3, %s361
        $region56: #{_fwd.1} parent=31 // pred_fallthru
          _
      $region32: #{_fwd.1} parent=5 // pred_fallthru
        _
      %p363 = scmp.le.s32.totalorder 2, %s10
      // Predicated region
      $region57: #{_fwd.1} parent=5 // pred_check
        %p364 = pneg %p363
      $region58: #{_fwd.1} parent=5 // pred_check_branch
        %366 = sbr.rel (%p364) target = $region60
      $region59: #{_fwd.1} parent=5 // pred_region
        %s367 = ssub.s32 %s10, 2
      $region60: #{_fwd.1} parent=5 // pred_fallthru
        _
    $region6: #{_fwd.1} parent=1 // loop_footer
      %s14 = sadd.s32 1, %s10
    $region7: #{_fwd.1} parent=1 // loop_footer_branch
      %9 = sbr.rel target = $region3
    $region8: #{_fwd.1} parent=1 // loop_exit
      _
    %368 = vsyncpa [#allocation4], 1
    %s369 = scalar_lea.sflag [#allocation4], 1
    %370 = vsyncpa %s369, 1

</llo_original>
